<compile_context>
chip_gen: v7x
topology: tpu7x:2x2x1
jax: 0.10.0
libtpu: 0.0.40
codegen_flags: <defaults>
</compile_context>

<pallas_src>
import functools
import math

import jax
import jax.numpy as jnp
from jax.experimental import pallas as pl
from jax.experimental.pallas import tpu as pltpu


def _round_up(x: int, m: int) -> int:
    return (x + m - 1) // m * m


# ----------------------------------------------------------------------------
# Pallas kernel: fused linear + per-group log-softmax normalization
# ----------------------------------------------------------------------------
def _multicat_kernel(x_ref, w_ref, b_ref, out_ref, *, output_dims):
    # x_ref: (TILE_B, K) native dtype   w_ref: (K, N_pad) native dtype
    # b_ref: (1, N_pad) f32             out_ref: (TILE_B, N_pad) f32
    # MXU matmul in the operands' native dtype, f32 accumulation.
    logits = jnp.dot(x_ref[...], w_ref[...], preferred_element_type=jnp.float32)
    logits = logits + b_ref[...]

    # Static per-group lane masks (groups are compile-time constants).
    col = jax.lax.broadcasted_iota(jnp.int32, logits.shape, dimension=1)
    masks = []
    off = 0
    for d in output_dims:
        masks.append((col >= off) & (col < off + d))
        off += d

    # Pass 1: per-group max, scattered to full lane width.
    m_full = jnp.zeros_like(logits)
    for mask in masks:
        m = jnp.max(jnp.where(mask, logits, -jnp.inf), axis=-1, keepdims=True)
        m_full = jnp.where(mask, m, m_full)

    # Single exp over all lanes (EUP work is B*N, not G*B*N).
    e = jnp.exp(logits - m_full)

    # Pass 2: per-group sum -> logsumexp, scattered to full lane width.
    lse_full = jnp.zeros_like(logits)
    for mask in masks:
        s = jnp.sum(jnp.where(mask, e, 0.0), axis=-1, keepdims=True)
        lse_full = jnp.where(mask, m_full + jnp.log(s), lse_full)

    out_ref[...] = logits - lse_full


def multicategorical_forward(x, weight, bias, output_dims, *, tile_b=256):
    """x: (B, K); weight: (N, K) [torch Linear layout]; bias: (N,).

    Returns a list of per-group normalized logits (len(output_dims) arrays),
    mirroring [dist.logits for dist in MultiCategorical(...).base_dists].
    x / weight may be f32 or bf16; they are fed to the MXU un-cast.
    """
    B, K = x.shape
    N = sum(output_dims)
    assert weight.shape == (N, K) and bias.shape == (N,)
    assert all(int(d) > 0 for d in output_dims), "output_dims entries must be > 0"

    # Lane-dense output: pad total_out to a multiple of 128.
    n_pad = _round_up(N, 128)
    # Batch tile: MXU-friendly 256 rows when the batch is large, otherwise a
    # single sublane-aligned block.
    if B < tile_b:
        tile_b = max(8, _round_up(B, 8))
    b_pad = _round_up(B, tile_b)

    # Padded operands. Padded weight columns / bias are zero -> padded logits
    # are benign and sliced off after the call.
    w_t = jnp.zeros((K, n_pad), weight.dtype).at[:, :N].set(weight.T)
    b2 = jnp.zeros((1, n_pad), jnp.float32).at[:, :N].set(bias.astype(jnp.float32))
    x_p = x if b_pad == B else jnp.zeros((b_pad, K), x.dtype).at[:B, :].set(x)

    # VMEM budget (v7x has 64 MiB physical / 32 MiB scoped default):
    #   double-buffered x and out tiles + resident weight/bias + margin.
    itemsize = jnp.dtype(x.dtype).itemsize
    vmem_bytes = (2 * 2 * (tile_b * K * itemsize + tile_b * n_pad * 4)
                  + K * n_pad * jnp.dtype(weight.dtype).itemsize + n_pad * 4
                  + (4 << 20))
    vmem_bytes = int(min(max(vmem_bytes, 16 << 20), 48 << 20))

    kernel = functools.partial(_multicat_kernel, output_dims=tuple(int(d) for d in output_dims))

    # TODO(synk): for production-sized K, add a trailing "arbitrary" K grid
    # axis with a (tile_b, n_pad) f32 VMEM accumulator (P3 pattern) so the
    # resident weight tile stays within the v7x 64 MiB budget.
    out = pl.pallas_call(
        kernel,
        out_shape=jax.ShapeDtypeStruct((b_pad, n_pad), jnp.float32),
        grid=(b_pad // tile_b,),
        in_specs=[
            pl.BlockSpec((tile_b, K), lambda i: (i, 0)),   # streamed per tile
            pl.BlockSpec((K, n_pad), lambda i: (0, 0)),    # resident in VMEM
            pl.BlockSpec((1, n_pad), lambda i: (0, 0)),    # resident in VMEM
        ],
        out_specs=pl.BlockSpec((tile_b, n_pad), lambda i: (i, 0)),
        compiler_params=pltpu.CompilerParams(
            dimension_semantics=("parallel",),
            vmem_limit_bytes=vmem_bytes,
        ),
    )(x_p, w_t, b2)

    out = out[:B, :N]
    # Plain-JAX glue: split concatenated normalized logits back into groups.
    splits = []
    off = 0
    for d in output_dims:
        splits.append(out[:, off:off + d])
        off += d
    return splits


# ----------------------------------------------------------------------------
# Lightweight MultiCategorical wrapper (plain JAX, operates on kernel output)
# ----------------------------------------------------------------------------
class MultiCategorical:
    def __init__(self, logits):
        # logits: list of already-normalized per-group logits
        self.logits = logits

    @property
    def mode(self):
        return jnp.stack([jnp.argmax(l, axis=-1) for l in self.logits], axis=-1)

    def log_prob(self, value):
        lps = []
        for i, l in enumerate(self.logits):
            lps.append(jnp.take_along_axis(l, value[..., i:i + 1], axis=-1)[..., 0])
        return jnp.stack(lps, axis=-1).sum(axis=-1)

    def entropy(self):
        ents = [-(jnp.exp(l) * l).sum(axis=-1) for l in self.logits]
        return jnp.stack(ents, axis=-1).sum(axis=-1)

    # TODO(synk): sample() needs per-group Gumbel/categorical RNG; done with
    # jax.random outside the kernel if needed.


# ----------------------------------------------------------------------------
# Main: deterministic params (torch nn.Linear-style init), run, verify
# ----------------------------------------------------------------------------
if __name__ == "__main__":
    key = jax.random.PRNGKey(0)
    B, input_dim = 8, 32
    output_dims = [3, 4, 5]
    N = sum(output_dims)

    k_x, k_w, k_b = jax.random.split(key, 3)
    x = jax.random.normal(k_x, (B, input_dim), dtype=jnp.float32)

    # torch nn.Linear default init: U(-1/sqrt(fan_in), 1/sqrt(fan_in))
    bound = 1.0 / math.sqrt(input_dim)
    weight = jax.random.uniform(k_w, (N, input_dim), jnp.float32, -bound, bound)
    bias = jax.random.uniform(k_b, (N,), jnp.float32, -bound, bound)

    logits_list = multicategorical_forward(x, weight, bias, output_dims)
    logits_list = [jax.block_until_ready(l) for l in logits_list]

    # Pure-JAX reference
    raw = x @ weight.T + bias
    off = 0
    ok = True
    for d, got in zip(output_dims, logits_list):
        g = raw[:, off:off + d]
        ref = g - jax.scipy.special.logsumexp(g, axis=-1, keepdims=True)
        ok &= bool(jnp.allclose(got, ref, atol=1e-5, rtol=1e-5))
        off += d

    # Exercise the distribution wrapper once
    dist = MultiCategorical(logits_list)
    _ = jax.block_until_ready(dist.mode)
    _ = jax.block_until_ready(dist.entropy())
    _ = jax.block_until_ready(dist.log_prob(dist.mode))

    if ok:
        print("KERNEL_OK")
    else:
        raise SystemExit("mismatch vs reference")
</pallas_src>

<mosaic_0001>
module attributes {stable_mosaic.version = 11 : i64} {
  func.func @_multicat_kernel(%arg0: i32, %arg1: memref<8x32xf32, #tpu.memory_space<vmem>>, %arg2: memref<32x128xf32, #tpu.memory_space<vmem>>, %arg3: memref<1x128xf32, #tpu.memory_space<vmem>>, %arg4: memref<8x128xf32, #tpu.memory_space<vmem>>) attributes {dimension_semantics = [#tpu.dimension_semantics<parallel>], iteration_bounds = array<i64: 1>, scalar_prefetch = 0 : i64, scratch_operands = 0 : i64, tpu.core_type = #tpu.core_type<tc>, window_params = [{transform_indices = @transform_0, window_bounds = array<i64: 8, 32>}, {pipeline_mode = #tpu.pipeline_mode<synchronous>, transform_indices = @transform_1, window_bounds = array<i64: 32, 128>}, {pipeline_mode = #tpu.pipeline_mode<synchronous>, transform_indices = @transform_2, window_bounds = array<i64: 1, 128>}, {transform_indices = @transform_3, window_bounds = array<i64: 8, 128>}]} {
    %c0 = arith.constant 0 : index
    %c0_0 = arith.constant 0 : index
    %0 = vector.load %arg1[%c0, %c0_0] : memref<8x32xf32, #tpu.memory_space<vmem>>, vector<8x32xf32>
    %c0_1 = arith.constant 0 : index
    %c0_2 = arith.constant 0 : index
    %1 = vector.load %arg2[%c0_1, %c0_2] : memref<32x128xf32, #tpu.memory_space<vmem>>, vector<32x128xf32>
    %cst = arith.constant dense<0.000000e+00> : vector<8x128xf32>
    %2 = tpu.matmul %0, %1, %cst {dimension_numbers = #tpu.dot_dimension_numbers<[1], [0], [0], [1], [0, 0, 1, 1], [], []>} : vector<8x32xf32>, vector<32x128xf32>, vector<8x128xf32> -> vector<8x128xf32>
    %c0_3 = arith.constant 0 : index
    %c0_4 = arith.constant 0 : index
    %3 = vector.load %arg3[%c0_3, %c0_4] : memref<1x128xf32, #tpu.memory_space<vmem>>, vector<1x128xf32>
    %4 = vector.broadcast %3 : vector<1x128xf32> to vector<8x128xf32>
    %5 = arith.addf %2, %4 : vector<8x128xf32>
    %6 = tpu.iota {dimensions = array<i32: 1>} : vector<8x128xi32>
    %c0_i32 = arith.constant 0 : i32
    %7 = vector.broadcast %c0_i32 : i32 to vector<8x128xi32>
    %8 = arith.cmpi sge, %6, %7 : vector<8x128xi32>
    %c3_i32 = arith.constant 3 : i32
    %9 = vector.broadcast %c3_i32 : i32 to vector<8x128xi32>
    %10 = arith.cmpi slt, %6, %9 : vector<8x128xi32>
    %11 = arith.andi %8, %10 : vector<8x128xi1>
    %c3_i32_5 = arith.constant 3 : i32
    %12 = vector.broadcast %c3_i32_5 : i32 to vector<8x128xi32>
    %13 = arith.cmpi sge, %6, %12 : vector<8x128xi32>
    %c7_i32 = arith.constant 7 : i32
    %14 = vector.broadcast %c7_i32 : i32 to vector<8x128xi32>
    %15 = arith.cmpi slt, %6, %14 : vector<8x128xi32>
    %16 = arith.andi %13, %15 : vector<8x128xi1>
    %c7_i32_6 = arith.constant 7 : i32
    %17 = vector.broadcast %c7_i32_6 : i32 to vector<8x128xi32>
    %18 = arith.cmpi sge, %6, %17 : vector<8x128xi32>
    %c12_i32 = arith.constant 12 : i32
    %19 = vector.broadcast %c12_i32 : i32 to vector<8x128xi32>
    %20 = arith.cmpi slt, %6, %19 : vector<8x128xi32>
    %21 = arith.andi %18, %20 : vector<8x128xi1>
    %cst_7 = arith.constant 0.000000e+00 : f32
    %22 = vector.broadcast %cst_7 : f32 to vector<8x128xf32>
    %cst_8 = arith.constant 0xFF800000 : f32
    %23 = vector.broadcast %cst_8 : f32 to vector<8x128xf32>
    %24 = arith.select %11, %5, %23 : vector<8x128xi1>, vector<8x128xf32>
    %cst_9 = arith.constant dense<0xFF800000> : vector<8xf32>
    %25 = vector.multi_reduction <maximumf>, %24, %cst_9 [1] : vector<8x128xf32> to vector<8xf32>
    %26 = vector.shape_cast %25 : vector<8xf32> to vector<8x1xf32>
    %27 = vector.shape_cast %26 : vector<8x1xf32> to vector<8x1xf32>
    %28 = vector.broadcast %27 : vector<8x1xf32> to vector<8x128xf32>
    %29 = arith.select %11, %28, %22 : vector<8x128xi1>, vector<8x128xf32>
    %cst_10 = arith.constant 0xFF800000 : f32
    %30 = vector.broadcast %cst_10 : f32 to vector<8x128xf32>
    %31 = arith.select %16, %5, %30 : vector<8x128xi1>, vector<8x128xf32>
    %cst_11 = arith.constant dense<0xFF800000> : vector<8xf32>
    %32 = vector.multi_reduction <maximumf>, %31, %cst_11 [1] : vector<8x128xf32> to vector<8xf32>
    %33 = vector.shape_cast %32 : vector<8xf32> to vector<8x1xf32>
    %34 = vector.shape_cast %33 : vector<8x1xf32> to vector<8x1xf32>
    %35 = vector.broadcast %34 : vector<8x1xf32> to vector<8x128xf32>
    %36 = arith.select %16, %35, %29 : vector<8x128xi1>, vector<8x128xf32>
    %cst_12 = arith.constant 0xFF800000 : f32
    %37 = vector.broadcast %cst_12 : f32 to vector<8x128xf32>
    %38 = arith.select %21, %5, %37 : vector<8x128xi1>, vector<8x128xf32>
    %cst_13 = arith.constant dense<0xFF800000> : vector<8xf32>
    %39 = vector.multi_reduction <maximumf>, %38, %cst_13 [1] : vector<8x128xf32> to vector<8xf32>
    %40 = vector.shape_cast %39 : vector<8xf32> to vector<8x1xf32>
    %41 = vector.shape_cast %40 : vector<8x1xf32> to vector<8x1xf32>
    %42 = vector.broadcast %41 : vector<8x1xf32> to vector<8x128xf32>
    %43 = arith.select %21, %42, %36 : vector<8x128xi1>, vector<8x128xf32>
    %44 = arith.subf %5, %43 : vector<8x128xf32>
    %45 = math.exp %44 : vector<8x128xf32>
    %cst_14 = arith.constant 0.000000e+00 : f32
    %46 = vector.broadcast %cst_14 : f32 to vector<8x128xf32>
    %cst_15 = arith.constant 0.000000e+00 : f32
    %47 = vector.broadcast %cst_15 : f32 to vector<8x128xf32>
    %48 = arith.select %11, %45, %47 : vector<8x128xi1>, vector<8x128xf32>
    %cst_16 = arith.constant dense<0.000000e+00> : vector<8xf32>
    %49 = vector.multi_reduction <add>, %48, %cst_16 [1] : vector<8x128xf32> to vector<8xf32>
    %50 = vector.shape_cast %49 : vector<8xf32> to vector<8x1xf32>
    %51 = math.log %50 : vector<8x1xf32>
    %52 = vector.broadcast %51 : vector<8x1xf32> to vector<8x128xf32>
    %53 = arith.addf %43, %52 : vector<8x128xf32>
    %54 = arith.select %11, %53, %46 : vector<8x128xi1>, vector<8x128xf32>
    %cst_17 = arith.constant 0.000000e+00 : f32
    %55 = vector.broadcast %cst_17 : f32 to vector<8x128xf32>
    %56 = arith.select %16, %45, %55 : vector<8x128xi1>, vector<8x128xf32>
    %cst_18 = arith.constant dense<0.000000e+00> : vector<8xf32>
    %57 = vector.multi_reduction <add>, %56, %cst_18 [1] : vector<8x128xf32> to vector<8xf32>
    %58 = vector.shape_cast %57 : vector<8xf32> to vector<8x1xf32>
    %59 = math.log %58 : vector<8x1xf32>
    %60 = vector.broadcast %59 : vector<8x1xf32> to vector<8x128xf32>
    %61 = arith.addf %43, %60 : vector<8x128xf32>
    %62 = arith.select %16, %61, %54 : vector<8x128xi1>, vector<8x128xf32>
    %cst_19 = arith.constant 0.000000e+00 : f32
    %63 = vector.broadcast %cst_19 : f32 to vector<8x128xf32>
    %64 = arith.select %21, %45, %63 : vector<8x128xi1>, vector<8x128xf32>
    %cst_20 = arith.constant dense<0.000000e+00> : vector<8xf32>
    %65 = vector.multi_reduction <add>, %64, %cst_20 [1] : vector<8x128xf32> to vector<8xf32>
    %66 = vector.shape_cast %65 : vector<8xf32> to vector<8x1xf32>
    %67 = math.log %66 : vector<8x1xf32>
    %68 = vector.broadcast %67 : vector<8x1xf32> to vector<8x128xf32>
    %69 = arith.addf %43, %68 : vector<8x128xf32>
    %70 = arith.select %21, %69, %62 : vector<8x128xi1>, vector<8x128xf32>
    %71 = arith.subf %5, %70 : vector<8x128xf32>
    %c0_21 = arith.constant 0 : index
    %c0_22 = arith.constant 0 : index
    %72 = vector.load %arg4[%c0_21, %c0_22] : memref<8x128xf32, #tpu.memory_space<vmem>>, vector<8x128xf32>
    tpu.vector_store %arg4[%c0_21, %c0_22], %71 {strides = array<i32>} : memref<8x128xf32, #tpu.memory_space<vmem>>, vector<8x128xf32>,
    return
  }
  func.func @transform_0(%arg0: i32) -> (i32, i32) {
    %c0_i32 = arith.constant 0 : i32
    %c0_i32_0 = arith.constant 0 : i32
    return %arg0, %c0_i32 : i32, i32
  }
  func.func @transform_1(%arg0: i32) -> (i32, i32) {
    %c0_i32 = arith.constant 0 : i32
    %c0_i32_0 = arith.constant 0 : i32
    %c0_i32_1 = arith.constant 0 : i32
    return %c0_i32, %c0_i32_0 : i32, i32
  }
  func.func @transform_2(%arg0: i32) -> (i32, i32) {
    %c0_i32 = arith.constant 0 : i32
    %c0_i32_0 = arith.constant 0 : i32
    %c0_i32_1 = arith.constant 0 : i32
    return %c0_i32, %c0_i32_0 : i32, i32
  }
  func.func @transform_3(%arg0: i32) -> (i32, i32) {
    %c0_i32 = arith.constant 0 : i32
    %c0_i32_0 = arith.constant 0 : i32
    return %arg0, %c0_i32 : i32, i32
  }
}

</mosaic_0001>

<llo_original>
// kernel: tpu_custom_call.1
$region0: #{tpu_custom_call.1}
  #allocation0 [shape = 'u32[]', space=smem, size = 0x4, offset = 0x4, fixed_abs, tag = 'smem constant byte address 0x4 - core index']
  #allocation1 [shape = 'u32[144,128]{1,0:T(1,128)}', space=vmem, size = 0x12000, scoped, tag = 'internal scratch']
  %s0 = inlined_call_operand.hbm [shape: f32[8,32], index: 0, kind: input, shape index: {}]
  %s1 = inlined_call_operand.hbm [shape: f32[32,128], index: 1, kind: input, shape index: {}]
  %s2 = inlined_call_operand.vmem [shape: f32[1,128], index: 2, kind: input, shape index: {}]
  %s3 = inlined_call_operand.hbm [shape: f32[8,128], index: 3, kind: output, shape index: {}]
  %s4 = sld [smem:[#allocation0]]
  $region30: #{tpu_custom_call.1} parent=0
    _
  %s6 = ssub.s32 1, %s4
  %s7 = scalar_select 0, %s6, %s4
  $region1: #{tpu_custom_call.1} parent=0
    #allocation2 [shape = 'u8[4096]{0}', space=vmem, size = 0x1000, scoped, tag = 'input window, operand 0, single buffered']
    #allocation3 [shape = 's32[1]{0}', space=sflag, size = 0x4, scoped, tag = 'scoped memory for tpu_custom_call.1']
    #allocation4 [shape = 's32[1]{0}', space=sflag, size = 0x4, scoped, tag = 'scoped memory for tpu_custom_call.1']
    #allocation5 [shape = 'u8[16384]{0}', space=vmem, size = 0x4000, scoped, tag = 'input window, operand 1, single buffered']
    #allocation6 [shape = 's32[1]{0}', space=sflag, size = 0x4, scoped, tag = 'scoped memory for tpu_custom_call.1']
    #allocation7 [shape = 'u8[4096]{0}', space=vmem, size = 0x1000, scoped, tag = 'output window, operand 0, single buffered']
    %8 = vsyncpa [#allocation3], 0
    %9 = vsyncpa [#allocation6], 0
    %10 = vsyncpa [#allocation4], 0
    // Predicated region
    $region2: #{tpu_custom_call.1} parent=1 // pred_check
      _
    $region3: #{tpu_custom_call.1} parent=1 // pred_check_branch
      %12 = sbr.rel (0) target = $region5
    $region4: #{tpu_custom_call.1} parent=1 // pred_region
      %s14 = ssub.s32 128, 128
      %15 = vsyncadd [#allocation3], %s14
      %s17 = sshll.u32 [#allocation2], 4
      %s18 = int_to_ptr.vmem [resolvable:$true] %s17
      %20 = dma.hbm_to_vmem [thread:$0]  %s0, 128, %s18, [#allocation3]
    $region5: #{tpu_custom_call.1} parent=1 // pred_fallthru
      _
    // Predicated region
    $region6: #{tpu_custom_call.1} parent=1 // pred_check
      _
    $region7: #{tpu_custom_call.1} parent=1 // pred_check_branch
      %22 = sbr.rel (0) target = $region9
    $region8: #{tpu_custom_call.1} parent=1 // pred_region
      %s24 = ssub.s32 512, 512
      %25 = vsyncadd [#allocation6], %s24
      %s26 = sshll.u32 [#allocation5], 4
      %s27 = int_to_ptr.vmem [resolvable:$true] %s26
      %32 = dma.hbm_to_vmem [thread:$0]  %s1, 512, %s27, [#allocation6], 128, 128, 8
    $region9: #{tpu_custom_call.1} parent=1 // pred_fallthru
      _
    // Predicated region
    $region10: #{tpu_custom_call.1} parent=1 // pred_check
      _
    $region11: #{tpu_custom_call.1} parent=1 // pred_check_branch
      %34 = sbr.rel (0) target = $region13
    $region12: #{tpu_custom_call.1} parent=1 // pred_region
      _
    $region13: #{tpu_custom_call.1} parent=1 // pred_fallthru
      _
    // Predicated region
    $region14: #{tpu_custom_call.1} parent=1 // pred_check
      _
    $region15: #{tpu_custom_call.1} parent=1 // pred_check_branch
      %36 = sbr.rel (0) target = $region17
    $region16: #{tpu_custom_call.1} parent=1 // pred_region
      %37 = dma.done [#allocation3], 128
    $region17: #{tpu_custom_call.1} parent=1 // pred_fallthru
      _
    // Predicated region
    $region18: #{tpu_custom_call.1} parent=1 // pred_check
      _
    $region19: #{tpu_custom_call.1} parent=1 // pred_check_branch
      %39 = sbr.rel (0) target = $region21
    $region20: #{tpu_custom_call.1} parent=1 // pred_region
      %40 = dma.done [#allocation6], 512
    $region21: #{tpu_custom_call.1} parent=1 // pred_fallthru
      _
    %v41 = vld [vmem:[#allocation2] sm:$0xff]
    %v42 = vld [vmem:[#allocation5] sm:$0xff]
    %v43 = vld [vmem:[#allocation5 + $0x8] sm:$0xff]
    %v44 = vld [vmem:[#allocation5 + $0x10] sm:$0xff]
    %v45 = vld [vmem:[#allocation5 + $0x18] sm:$0xff]
    %v46 = vld [vmem:[%s2] sm:$0x1]
    %v48 = vlaneseq
    %v49 = vshrl.u32 %v48, 7
    %v50 = vsub.s32 0, %v49
    %v51 = vrot.slane %v46, %v50
    %vm53 = vcmask 261120
    %v55 = vsel %vm53, %v41, 0
    %57 = vmatprep.subr.mxu0 0.0
    %58 = vmatpush1.msra.mxu0 %v42
    %59 = vmatprep.subr.mxu0 0.0
    %60 = vmatpush1.msra.mxu0 %v43
    %61 = vmatprep.subr.mxu0 0.0
    %62 = vmatpush1.msra.mxu0 %v44
    %63 = vmatprep.subr.mxu0 0.0
    %64 = vmatpush1.msra.mxu0 %v45
    %65 = vmatprep.subr.mxu0 0.0
    %66 = vmatpush1.msra.mxu0 0.0
    %67 = vmatprep.subr.mxu0 0.0
    %68 = vmatpush1.msra.mxu0 0.0
    %69 = vmatprep.subr.mxu0 0.0
    %70 = vmatpush1.msra.mxu0 0.0
    %71 = vmatprep.subr.mxu0 0.0
    %72 = vmatpush1.msra.mxu0 0.0
    %73 = vmatprep.subr.mxu0 0.0
    %74 = vmatpush1.msra.mxu0 0.0
    %75 = vmatprep.subr.mxu0 0.0
    %76 = vmatpush1.msra.mxu0 0.0
    %77 = vmatprep.subr.mxu0 0.0
    %78 = vmatpush1.msra.mxu0 0.0
    %79 = vmatprep.subr.mxu0 0.0
    %80 = vmatpush1.msra.mxu0 0.0
    %81 = vmatprep.subr.mxu0 0.0
    %82 = vmatpush1.msra.mxu0 0.0
    %83 = vmatprep.subr.mxu0 0.0
    %84 = vmatpush1.msra.mxu0 0.0
    %85 = vmatprep.subr.mxu0 0.0
    %86 = vmatpush1.msra.mxu0 0.0
    %87 = vmatprep.subr.mxu0 0.0
    %88 = vmatpush1.msra.mxu0 0.0
    %89 = vmatprep.subr.mxu0 0.0
    %90 = vmatpush1.msra.mxu0 0.0
    %91 = vmatprep.subr.mxu0 0.0
    %92 = vmatpush1.msra.mxu0 0.0
    %93 = vmatprep.subr.mxu0 0.0
    %94 = vmatpush1.msra.mxu0 0.0
    %95 = vmatprep.subr.mxu0 0.0
    %96 = vmatpush1.msra.mxu0 0.0
    %97 = vmatprep.subr.mxu0 0.0
    %98 = vmatpush1.msra.mxu0 0.0
    %99 = vmatprep.subr.mxu0 0.0
    %100 = vmatpush1.msra.mxu0 0.0
    %101 = vmatprep.subr.mxu0 0.0
    %102 = vmatpush1.msra.mxu0 0.0
    %103 = vmatprep.subr.mxu0 0.0
    %104 = vmatpush1.msra.mxu0 0.0
    %105 = vmatprep.subr.mxu0 0.0
    %106 = vmatpush1.msra.mxu0 0.0
    %107 = vmatprep.subr.mxu0 0.0
    %108 = vmatpush1.msra.mxu0 0.0
    %109 = vmatprep.subr.mxu0 0.0
    %110 = vmatpush1.msra.mxu0 0.0
    %111 = vmatprep.subr.mxu0 0.0
    %112 = vmatpush1.msra.mxu0 0.0
    %113 = vmatprep.subr.mxu0 0.0
    %114 = vmatpush1.msra.mxu0 0.0
    %115 = vmatprep.subr.mxu0 0.0
    %116 = vmatpush1.msra.mxu0 0.0
    %117 = vmatprep.subr.mxu0 0.0
    %118 = vmatpush1.msra.mxu0 0.0
    %119 = vmatprep.subr.mxu0 0.0
    %120 = vmatpush1.msra.mxu0 0.0
    %121 = vmatprep.mubr.f32.mxu0 0.0
    %122 = vmatmul.mubr.f32.gmra.mrb[0].mxu0 %v55
    %v123 = vpop.f32.mrb[0].mxu0
    %v124 = vadd.f32 %v51, %v123
    %v125 = vpop.f32.mrb[0].mxu0
    %126 = vdwg.mxu0
    %v127 = vlaneseq
    %v128 = vand.u32 %v127, 127
    %vm129 = vcmp.ge.s32.totalorder %v128, 0
    %vm130 = vcmp.lt.s32.totalorder %v128, 3
    %vm131 = vmand %vm129, %vm130
    %vm132 = vcmp.ge.s32.totalorder %v128, 3
    %vm133 = vcmp.lt.s32.totalorder %v128, 7
    %vm134 = vmand %vm132, %vm133
    %vm135 = vcmp.ge.s32.totalorder %v128, 7
    %vm136 = vcmp.lt.s32.totalorder %v128, 12
    %vm137 = vmand %vm135, %vm136
    %v138 = vsel %vm131, %v124, -inf
    %139 = vmax.xlane.f32.xlu0 %v138
    %v140 = vpop.xlane.xlu0 %139
    %v141 = vsel %vm131, %v140, 0.0
    %v142 = vsel %vm134, %v124, -inf
    %143 = vmax.xlane.f32.xlu0 %v142
    %v144 = vpop.xlane.xlu0 %143
    %v145 = vsel %vm134, %v144, %v141
    %v146 = vsel %vm137, %v124, -inf
    %147 = vmax.xlane.f32.xlu0 %v146
    %v148 = vpop.xlane.xlu0 %147
    %v149 = vsel %vm137, %v148, %v145
    %v150 = vsub.f32 %v124, %v149
    %v151 = vmul.f32 %v150, 1.442695
    %v152 = vpow.pop %v151
    %v153 = vsel %vm131, %v152, 0.0
    %154 = vadd.xlane.f32.xlu0 %v153
    %v155 = vpop.xlane.xlu0 %154
    %v156 = vlog2.pop %v155
    %v157 = vmul.f32 %v156, 0.6931472
    %v158 = vadd.f32 %v149, %v157
    %v159 = vsel %vm131, %v158, 0.0
    %v160 = vsel %vm134, %v152, 0.0
    %161 = vadd.xlane.f32.xlu0 %v160
    %v162 = vpop.xlane.xlu0 %161
    %v163 = vlog2.pop %v162
    %v164 = vmul.f32 %v163, 0.6931472
    %v165 = vadd.f32 %v149, %v164
    %v166 = vsel %vm134, %v165, %v159
    %v167 = vsel %vm137, %v152, 0.0
    %168 = vadd.xlane.f32.xlu0 %v167
    %v169 = vpop.xlane.xlu0 %168
    %v170 = vlog2.pop %v169
    %v171 = vmul.f32 %v170, 0.6931472
    %v172 = vadd.f32 %v149, %v171
    %v173 = vsel %vm137, %v172, %v166
    %v174 = vsub.f32 %v124, %v173
    %175 = vst [vmem:[#allocation7] sm:$0xff] %v174
    // Predicated region
    $region22: #{tpu_custom_call.1} parent=1 // pred_check
      _
    $region23: #{tpu_custom_call.1} parent=1 // pred_check_branch
      %177 = sbr.rel (0) target = $region25
    $region24: #{tpu_custom_call.1} parent=1 // pred_region
      %s179 = ssub.s32 128, 128
      %180 = vsyncadd [#allocation4], %s179
      %s182 = sshll.u32 [#allocation7], 4
      %s183 = int_to_ptr.vmem [resolvable:$true] %s182
      %185 = dma.vmem_to_hbm [thread:$0]  %s183, 128, %s3, [#allocation4]
    $region25: #{tpu_custom_call.1} parent=1 // pred_fallthru
      _
    // Predicated region
    $region26: #{tpu_custom_call.1} parent=1 // pred_check
      _
    $region27: #{tpu_custom_call.1} parent=1 // pred_check_branch
      %187 = sbr.rel (0) target = $region29
    $region28: #{tpu_custom_call.1} parent=1 // pred_region
      %188 = dma.done [#allocation4], 128
    $region29: #{tpu_custom_call.1} parent=1 // pred_fallthru
      _
    %189 = vsyncpa [#allocation3], 1
    %190 = vsyncpa [#allocation6], 1
    %191 = vsyncpa [#allocation4], 1

</llo_original>
